<compile_context>
chip_gen: v7x
topology: tpu7x:2x2x1
jax: 0.10.0
libtpu: 0.0.40
codegen_flags: <defaults>
</compile_context>

<pallas_src>
import functools

import jax
import jax.numpy as jnp
from jax.experimental import pallas as pl
from jax.experimental.pallas import tpu as pltpu


def _round_up(x, m):
    return ((x + m - 1) // m) * m


# ----------------------------------------------------------------------------
# Kernel: one grid axis over row tiles, scalar loss accumulated in SMEM.
# ----------------------------------------------------------------------------
def _uh_loss_kernel(
    head_ref, rel_ref, tail_ref, proj_ref,      # [TILE_M, Dp] row tiles
    tgt_ref, wt_ref, rw_ref,                    # [TILE_M, 1] target / weight / reg-weight
    lin_w_ref, lin_b_ref,                       # SMEM scalars: Linear(1, 1)
    loss_ref,                                   # SMEM (1,) scalar accumulator output
    *,
    function: str,
):
    step = pl.program_id(0)

    @pl.when(step == 0)
    def _():
        loss_ref[0] = jnp.float32(0.0)

    # Scalars read once per grid step (SMEM -> sreg).
    lin_w = lin_w_ref[0]
    lin_b = lin_b_ref[0]

    head = head_ref[...]
    rel = rel_ref[...]
    tail = tail_ref[...]
    proj = proj_ref[...]

    # Hyperplane projection: e - <e, w_r> * w_r   (padded lanes are zero).
    hp = head - jnp.sum(head * proj, axis=1, keepdims=True) * proj
    tp = tail - jnp.sum(tail * proj, axis=1, keepdims=True) * proj

    # score = Linear(1,1)( sum_d rel * (hp * tp) ), optional sigmoid.
    s = jnp.sum(rel * (hp * tp), axis=1, keepdims=True)        # [TILE_M, 1]
    p = lin_w * s + lin_b
    if function == "logi":
        p = jax.nn.sigmoid(p)

    # Weighted squared error:
    #   positive rows: (p - w)^2 / B ;  negative rows: p^2 * p_neg / (2*N*B);
    #   padded rows carry weight 0.
    err = wt_ref[...] * jnp.square(p - tgt_ref[...])

    # Regularizer (only positive rows carry a nonzero reg weight =
    # reg_scale / (2*B)); uses the PROJECTED head/tail, matching the module.
    reg = rw_ref[...] * (
        jnp.sum(jnp.square(hp), axis=1, keepdims=True)
        + jnp.sum(jnp.square(rel), axis=1, keepdims=True)
        + jnp.sum(jnp.square(tp), axis=1, keepdims=True)
    )

    loss_ref[0] += jnp.sum(err + reg)


# ----------------------------------------------------------------------------
# Wrapper: embedding gathers, branch merge, padding, pallas_call.
# ----------------------------------------------------------------------------
def uh_forward(
    params,
    h, r, t, w,
    n_hn, n_rel_hn, n_t,
    n_h, n_rel_tn, n_tn,
    *,
    batch_size, neg_per_positive, reg_scale, p_neg=1.0,
    function="logi", tile_m=512,
):
    ent = params["ent_embedding"]          # [num_cons, D]
    rel_tab = params["rel_embedding"]      # [num_rels, D]
    w_tab = params["w_embedding"]          # [num_rels, D] projection vectors
    lin_w = params["liner_w"].reshape(1).astype(jnp.float32)
    lin_b = params["liner_b"].reshape(1).astype(jnp.float32)

    D = ent.shape[1]
    B = h.shape[0]
    N = n_hn.shape[1]

    def emb(table, idx):
        return jnp.take(table, idx.reshape(-1), axis=0)

    # positive triple rows (projection vector indexed by r)
    h_e, r_e, t_e = emb(ent, h), emb(rel_tab, r), emb(ent, t)
    pr_e = emb(w_tab, r)
    # head-corrupted negatives (B*N rows), projection vector = w(n_rel_hn)
    hn_e, rhn_e, nt_e = emb(ent, n_hn), emb(rel_tab, n_rel_hn), emb(ent, n_t)
    phn_e = emb(w_tab, n_rel_hn)
    # tail-corrupted negatives (B*N rows), projection vector = w(n_rel_tn)
    nh_e, rtn_e, tn_e = emb(ent, n_h), emb(rel_tab, n_rel_tn), emb(ent, n_tn)
    ptn_e = emb(w_tab, n_rel_tn)

    # Single slab: [positives | head-corrupted | tail-corrupted].
    heads = jnp.concatenate([h_e, hn_e, nh_e], axis=0).astype(jnp.float32)
    rels = jnp.concatenate([r_e, rhn_e, rtn_e], axis=0).astype(jnp.float32)
    tails = jnp.concatenate([t_e, nt_e, tn_e], axis=0).astype(jnp.float32)
    projs = jnp.concatenate([pr_e, phn_e, ptn_e], axis=0).astype(jnp.float32)

    M = B + 2 * B * N
    bsz = float(batch_size)
    npp = float(neg_per_positive)
    neg_w = float(p_neg) / (2.0 * npp * bsz)

    weight = jnp.concatenate([
        jnp.full((B,), 1.0 / bsz, jnp.float32),
        jnp.full((2 * B * N,), neg_w, jnp.float32),
    ])
    target = jnp.concatenate([
        w.astype(jnp.float32).reshape(-1),
        jnp.zeros((2 * B * N,), jnp.float32),
    ])
    reg_w = jnp.concatenate([
        jnp.full((B,), float(reg_scale) / (2.0 * bsz), jnp.float32),
        jnp.zeros((2 * B * N,), jnp.float32),
    ])

    # Layout: pad features to a lane multiple (128), rows to the tile size
    # (multiple of 8 sublanes).  Padded rows carry zero weights.
    d_pad = _round_up(D, 128)
    tile = min(int(tile_m), _round_up(M, 8))
    m_pad = _round_up(M, tile)

    def pad_rows(x):
        return jnp.pad(x, ((0, m_pad - M), (0, d_pad - D)))

    heads, rels, tails, projs = map(pad_rows, (heads, rels, tails, projs))

    def pad_col(x):
        return jnp.pad(x, ((0, m_pad - M),)).reshape(m_pad, 1)

    target, weight, reg_w = map(pad_col, (target, weight, reg_w))

    grid = (m_pad // tile,)
    row_spec = pl.BlockSpec((tile, d_pad), lambda i: (i, 0))
    col_spec = pl.BlockSpec((tile, 1), lambda i: (i, 0))
    smem_spec = pl.BlockSpec(memory_space=pltpu.MemorySpace.SMEM)

    kernel = functools.partial(_uh_loss_kernel, function=function)

    loss = pl.pallas_call(
        kernel,
        grid=grid,
        out_shape=jax.ShapeDtypeStruct((1,), jnp.float32),
        in_specs=[
            row_spec, row_spec, row_spec, row_spec,   # heads, rels, tails, projs
            col_spec, col_spec, col_spec,             # target, weight, reg_w
            smem_spec, smem_spec,                     # liner weight / bias
        ],
        out_specs=smem_spec,
        compiler_params=pltpu.CompilerParams(
            dimension_semantics=("arbitrary",)),
    )(heads, rels, tails, projs, target, weight, reg_w, lin_w, lin_b)

    return loss[0]


# ----------------------------------------------------------------------------
# Pure-JAX reference mirroring the torch module (UH.main_loss).
# ----------------------------------------------------------------------------
def uh_reference(params, h, r, t, w, n_hn, n_rel_hn, n_t, n_h, n_rel_tn, n_tn,
                 *, batch_size, reg_scale, p_neg=1.0, function="logi"):
    ent, rel_tab, w_tab = (params["ent_embedding"], params["rel_embedding"],
                           params["w_embedding"])
    lw, lb = params["liner_w"].reshape(())[()], params["liner_b"].reshape(())[()]

    def projection(e, pv):
        return e - jnp.sum(e * pv, axis=-1, keepdims=True) * pv

    def embed(hi, ri, ti):
        eh, er, et = ent[hi], rel_tab[ri], ent[ti]
        pv = w_tab[ri]
        return projection(eh, pv), er, projection(et, pv)

    def liner(x):
        y = lw * x + lb
        return jax.nn.sigmoid(y) if function == "logi" else y

    head, rel, tail = embed(h, r, t)
    hn, rhn, nt = embed(n_hn, n_rel_hn, n_t)
    nh, rtn, tn = embed(n_h, n_rel_tn, n_tn)

    f_prob_h = liner(jnp.sum(rel * (head * tail), axis=1))
    f_score_h = jnp.square(f_prob_h - w)
    f_prob_hn = liner(jnp.sum(rhn * (hn * nt), axis=2))
    f_score_hn = jnp.mean(jnp.square(f_prob_hn), axis=1)
    f_prob_tn = liner(jnp.sum(rtn * (nh * tn), axis=2))
    f_score_tn = jnp.mean(jnp.square(f_prob_tn), axis=1)

    regularizer = (
        jnp.sum(jnp.square(head)) + jnp.sum(jnp.square(rel))
        + jnp.sum(jnp.square(tail))
    ) / 2.0 / batch_size
    this_loss = jnp.sum(
        (f_score_tn + f_score_hn) / 2.0 * p_neg + f_score_h
    ) / batch_size
    return this_loss + reg_scale * regularizer


# ----------------------------------------------------------------------------
# Deterministic parameter init + demo
# ----------------------------------------------------------------------------
def init_params(key, num_cons, num_rels, dim):
    k1, k2, k3, k4, k5 = jax.random.split(key, 5)

    def xavier(k, shape):
        bound = (6.0 / (shape[0] + shape[1])) ** 0.5
        return jax.random.uniform(k, shape, jnp.float32, -bound, bound)

    return {
        "ent_embedding": xavier(k1, (num_cons, dim)),
        "rel_embedding": xavier(k2, (num_rels, dim)),
        "w_embedding": xavier(k3, (num_rels, dim)),
        "liner_w": 0.3 * jax.random.normal(k4, (1,), jnp.float32),
        "liner_b": 0.3 * jax.random.normal(k5, (1,), jnp.float32),
    }


if __name__ == "__main__":
    NUM_CONS, NUM_RELS, DIM = 16, 8, 32
    BATCH, NEG = 8, 4
    REG_SCALE = 0.01
    P_NEG = 1.0          # the module hard-codes self._p_neg = 1
    FUNCTION = "logi"    # TODO(synk): param.function is external; fixed here.

    key = jax.random.PRNGKey(0)
    kp, kd = jax.random.split(key)
    params = init_params(kp, NUM_CONS, NUM_RELS, DIM)

    ks = jax.random.split(kd, 10)
    h = jax.random.randint(ks[0], (BATCH,), 0, NUM_CONS)
    r = jax.random.randint(ks[1], (BATCH,), 0, NUM_RELS)
    t = jax.random.randint(ks[2], (BATCH,), 0, NUM_CONS)
    w = jax.random.uniform(ks[3], (BATCH,), jnp.float32)
    n_hn = jax.random.randint(ks[4], (BATCH, NEG), 0, NUM_CONS)
    n_rel_hn = jax.random.randint(ks[5], (BATCH, NEG), 0, NUM_RELS)
    n_t = jax.random.randint(ks[6], (BATCH, NEG), 0, NUM_CONS)
    n_h = jax.random.randint(ks[7], (BATCH, NEG), 0, NUM_CONS)
    n_rel_tn = jax.random.randint(ks[8], (BATCH, NEG), 0, NUM_RELS)
    n_tn = jax.random.randint(ks[9], (BATCH, NEG), 0, NUM_CONS)

    loss = uh_forward(
        params, h, r, t, w, n_hn, n_rel_hn, n_t, n_h, n_rel_tn, n_tn,
        batch_size=BATCH, neg_per_positive=NEG, reg_scale=REG_SCALE,
        p_neg=P_NEG, function=FUNCTION,
    )
    loss = jax.block_until_ready(loss)

    ref = uh_reference(
        params, h, r, t, w, n_hn, n_rel_hn, n_t, n_h, n_rel_tn, n_tn,
        batch_size=BATCH, reg_scale=REG_SCALE, p_neg=P_NEG, function=FUNCTION,
    )
    assert jnp.allclose(loss, ref, rtol=1e-5, atol=1e-5), (loss, ref)

    print("KERNEL_OK")
</pallas_src>

<mosaic_0001>
module attributes {stable_mosaic.version = 11 : i64} {
  func.func @_uh_loss_kernel(%arg0: i32, %arg1: memref<72x128xf32, #tpu.memory_space<vmem>>, %arg2: memref<72x128xf32, #tpu.memory_space<vmem>>, %arg3: memref<72x128xf32, #tpu.memory_space<vmem>>, %arg4: memref<72x128xf32, #tpu.memory_space<vmem>>, %arg5: memref<72x1xf32, #tpu.memory_space<vmem>>, %arg6: memref<72x1xf32, #tpu.memory_space<vmem>>, %arg7: memref<72x1xf32, #tpu.memory_space<vmem>>, %arg8: memref<1xf32, #tpu.memory_space<smem>>, %arg9: memref<1xf32, #tpu.memory_space<smem>>, %arg10: memref<1xf32, #tpu.memory_space<smem>>) attributes {dimension_semantics = [#tpu.dimension_semantics<arbitrary>], iteration_bounds = array<i64: 1>, scalar_prefetch = 0 : i64, scratch_operands = 0 : i64, tpu.core_type = #tpu.core_type<tc>, window_params = [{transform_indices = @transform_0, window_bounds = array<i64: 72, 128>}, {transform_indices = @transform_1, window_bounds = array<i64: 72, 128>}, {transform_indices = @transform_2, window_bounds = array<i64: 72, 128>}, {transform_indices = @transform_3, window_bounds = array<i64: 72, 128>}, {transform_indices = @transform_4, window_bounds = array<i64: 72, 1>}, {transform_indices = @transform_5, window_bounds = array<i64: 72, 1>}, {transform_indices = @transform_6, window_bounds = array<i64: 72, 1>}, {transform_indices = @transform_7, window_bounds = array<i64: 1>}, {transform_indices = @transform_8, window_bounds = array<i64: 1>}, {transform_indices = @transform_9, window_bounds = array<i64: 1>}]} {
    %c0_i32 = arith.constant 0 : i32
    %0 = arith.cmpi eq, %arg0, %c0_i32 : i32
    %1 = arith.extui %0 : i1 to i32
    %c0_i32_0 = arith.constant 0 : i32
    %2 = arith.cmpi ne, %1, %c0_i32_0 : i32
    scf.if %2 {
      %cst_25 = arith.constant 0.000000e+00 : f32
      %c0_26 = arith.constant 0 : index
      %60 = memref.load %arg10[%c0_26] : memref<1xf32, #tpu.memory_space<smem>>
      memref.store %cst_25, %arg10[%c0_26] : memref<1xf32, #tpu.memory_space<smem>>
    } else {
    }
    %c0 = arith.constant 0 : index
    %3 = memref.load %arg8[%c0] : memref<1xf32, #tpu.memory_space<smem>>
    %c0_1 = arith.constant 0 : index
    %4 = memref.load %arg9[%c0_1] : memref<1xf32, #tpu.memory_space<smem>>
    %c0_2 = arith.constant 0 : index
    %c0_3 = arith.constant 0 : index
    %5 = vector.load %arg1[%c0_2, %c0_3] : memref<72x128xf32, #tpu.memory_space<vmem>>, vector<72x128xf32>
    %c0_4 = arith.constant 0 : index
    %c0_5 = arith.constant 0 : index
    %6 = vector.load %arg2[%c0_4, %c0_5] : memref<72x128xf32, #tpu.memory_space<vmem>>, vector<72x128xf32>
    %c0_6 = arith.constant 0 : index
    %c0_7 = arith.constant 0 : index
    %7 = vector.load %arg3[%c0_6, %c0_7] : memref<72x128xf32, #tpu.memory_space<vmem>>, vector<72x128xf32>
    %c0_8 = arith.constant 0 : index
    %c0_9 = arith.constant 0 : index
    %8 = vector.load %arg4[%c0_8, %c0_9] : memref<72x128xf32, #tpu.memory_space<vmem>>, vector<72x128xf32>
    %9 = arith.mulf %5, %8 : vector<72x128xf32>
    %cst = arith.constant dense<0.000000e+00> : vector<72xf32>
    %10 = vector.multi_reduction <add>, %9, %cst [1] : vector<72x128xf32> to vector<72xf32>
    %11 = vector.shape_cast %10 : vector<72xf32> to vector<72x1xf32>
    %12 = vector.broadcast %11 : vector<72x1xf32> to vector<72x128xf32>
    %13 = arith.mulf %12, %8 : vector<72x128xf32>
    %14 = arith.subf %5, %13 : vector<72x128xf32>
    %15 = arith.mulf %7, %8 : vector<72x128xf32>
    %cst_10 = arith.constant dense<0.000000e+00> : vector<72xf32>
    %16 = vector.multi_reduction <add>, %15, %cst_10 [1] : vector<72x128xf32> to vector<72xf32>
    %17 = vector.shape_cast %16 : vector<72xf32> to vector<72x1xf32>
    %18 = vector.broadcast %17 : vector<72x1xf32> to vector<72x128xf32>
    %19 = arith.mulf %18, %8 : vector<72x128xf32>
    %20 = arith.subf %7, %19 : vector<72x128xf32>
    %21 = arith.mulf %14, %20 : vector<72x128xf32>
    %22 = arith.mulf %6, %21 : vector<72x128xf32>
    %cst_11 = arith.constant dense<0.000000e+00> : vector<72xf32>
    %23 = vector.multi_reduction <add>, %22, %cst_11 [1] : vector<72x128xf32> to vector<72xf32>
    %24 = vector.shape_cast %23 : vector<72xf32> to vector<72x1xf32>
    %25 = vector.broadcast %3 : f32 to vector<72x1xf32>
    %26 = arith.mulf %25, %24 : vector<72x1xf32>
    %27 = vector.broadcast %4 : f32 to vector<72x1xf32>
    %28 = arith.addf %26, %27 : vector<72x1xf32>
    %29 = arith.negf %28 : vector<72x1xf32>
    %30 = math.exp %29 : vector<72x1xf32>
    %cst_12 = arith.constant 1.000000e+00 : f32
    %31 = vector.broadcast %cst_12 : f32 to vector<72x1xf32>
    %32 = arith.addf %31, %30 : vector<72x1xf32>
    %33 = arith.divf %31, %32 : vector<72x1xf32>
    %c0_13 = arith.constant 0 : index
    %c0_14 = arith.constant 0 : index
    %34 = vector.load %arg6[%c0_13, %c0_14] : memref<72x1xf32, #tpu.memory_space<vmem>>, vector<72x1xf32>
    %c0_15 = arith.constant 0 : index
    %c0_16 = arith.constant 0 : index
    %35 = vector.load %arg5[%c0_15, %c0_16] : memref<72x1xf32, #tpu.memory_space<vmem>>, vector<72x1xf32>
    %36 = arith.subf %33, %35 : vector<72x1xf32>
    %37 = arith.mulf %36, %36 : vector<72x1xf32>
    %38 = arith.mulf %34, %37 : vector<72x1xf32>
    %c0_17 = arith.constant 0 : index
    %c0_18 = arith.constant 0 : index
    %39 = vector.load %arg7[%c0_17, %c0_18] : memref<72x1xf32, #tpu.memory_space<vmem>>, vector<72x1xf32>
    %40 = arith.mulf %14, %14 : vector<72x128xf32>
    %cst_19 = arith.constant dense<0.000000e+00> : vector<72xf32>
    %41 = vector.multi_reduction <add>, %40, %cst_19 [1] : vector<72x128xf32> to vector<72xf32>
    %42 = vector.shape_cast %41 : vector<72xf32> to vector<72x1xf32>
    %43 = arith.mulf %6, %6 : vector<72x128xf32>
    %cst_20 = arith.constant dense<0.000000e+00> : vector<72xf32>
    %44 = vector.multi_reduction <add>, %43, %cst_20 [1] : vector<72x128xf32> to vector<72xf32>
    %45 = vector.shape_cast %44 : vector<72xf32> to vector<72x1xf32>
    %46 = arith.addf %42, %45 : vector<72x1xf32>
    %47 = arith.mulf %20, %20 : vector<72x128xf32>
    %cst_21 = arith.constant dense<0.000000e+00> : vector<72xf32>
    %48 = vector.multi_reduction <add>, %47, %cst_21 [1] : vector<72x128xf32> to vector<72xf32>
    %49 = vector.shape_cast %48 : vector<72xf32> to vector<72x1xf32>
    %50 = arith.addf %46, %49 : vector<72x1xf32>
    %51 = arith.mulf %39, %50 : vector<72x1xf32>
    %c0_22 = arith.constant 0 : index
    %52 = memref.load %arg10[%c0_22] : memref<1xf32, #tpu.memory_space<smem>>
    %53 = arith.addf %38, %51 : vector<72x1xf32>
    %54 = vector.shape_cast %53 : vector<72x1xf32> to vector<1x72x1xf32>
    %cst_23 = arith.constant dense<0.000000e+00> : vector<1xf32>
    %55 = vector.multi_reduction <add>, %54, %cst_23 [1, 2] : vector<1x72x1xf32> to vector<1xf32>
    %56 = vector.shape_cast %55 : vector<1xf32> to vector<1x1x1xf32>
    %57 = vector.extract %56[0, 0, 0] : f32 from vector<1x1x1xf32>
    %58 = arith.addf %52, %57 : f32
    %c0_24 = arith.constant 0 : index
    %59 = memref.load %arg10[%c0_24] : memref<1xf32, #tpu.memory_space<smem>>
    memref.store %58, %arg10[%c0_24] : memref<1xf32, #tpu.memory_space<smem>>
    return
  }
  func.func @transform_0(%arg0: i32) -> (i32, i32) {
    %c0_i32 = arith.constant 0 : i32
    %c0_i32_0 = arith.constant 0 : i32
    return %arg0, %c0_i32 : i32, i32
  }
  func.func @transform_1(%arg0: i32) -> (i32, i32) {
    %c0_i32 = arith.constant 0 : i32
    %c0_i32_0 = arith.constant 0 : i32
    return %arg0, %c0_i32 : i32, i32
  }
  func.func @transform_2(%arg0: i32) -> (i32, i32) {
    %c0_i32 = arith.constant 0 : i32
    %c0_i32_0 = arith.constant 0 : i32
    return %arg0, %c0_i32 : i32, i32
  }
  func.func @transform_3(%arg0: i32) -> (i32, i32) {
    %c0_i32 = arith.constant 0 : i32
    %c0_i32_0 = arith.constant 0 : i32
    return %arg0, %c0_i32 : i32, i32
  }
  func.func @transform_4(%arg0: i32) -> (i32, i32) {
    %c0_i32 = arith.constant 0 : i32
    %c0_i32_0 = arith.constant 0 : i32
    return %arg0, %c0_i32 : i32, i32
  }
  func.func @transform_5(%arg0: i32) -> (i32, i32) {
    %c0_i32 = arith.constant 0 : i32
    %c0_i32_0 = arith.constant 0 : i32
    return %arg0, %c0_i32 : i32, i32
  }
  func.func @transform_6(%arg0: i32) -> (i32, i32) {
    %c0_i32 = arith.constant 0 : i32
    %c0_i32_0 = arith.constant 0 : i32
    return %arg0, %c0_i32 : i32, i32
  }
  func.func @transform_7(%arg0: i32) -> i32 {
    %c0_i32 = arith.constant 0 : i32
    %c0_i32_0 = arith.constant 0 : i32
    return %c0_i32 : i32
  }
  func.func @transform_8(%arg0: i32) -> i32 {
    %c0_i32 = arith.constant 0 : i32
    %c0_i32_0 = arith.constant 0 : i32
    return %c0_i32 : i32
  }
  func.func @transform_9(%arg0: i32) -> i32 {
    %c0_i32 = arith.constant 0 : i32
    %c0_i32_0 = arith.constant 0 : i32
    return %c0_i32 : i32
  }
}

</mosaic_0001>

<llo_original>
// kernel: tpu_custom_call.1
$region0: #{tpu_custom_call.1}
  #allocation0 [shape = 'u32[]', space=smem, size = 0x4, offset = 0x4, fixed_abs, tag = 'smem constant byte address 0x4 - core index']
  #allocation1 [shape = 'u32[144,128]{1,0:T(1,128)}', space=vmem, size = 0x12000, scoped, tag = 'internal scratch']
  #allocation2 [shape = 'f32[1]{0:T(128)S(6)}', space=smem, size = 0x200, scoped, tag = 'scoped memory for tpu_custom_call.1']
  #allocation3 [shape = 'f32[1]{0:T(128)S(6)}', space=smem, size = 0x200, scoped, tag = 'scoped memory for tpu_custom_call.1']
  %s0 = inlined_call_operand.vmem [shape: f32[72,128], index: 0, kind: input, shape index: {}]
  %s1 = inlined_call_operand.vmem [shape: f32[72,128], index: 1, kind: input, shape index: {}]
  %s2 = inlined_call_operand.vmem [shape: f32[72,128], index: 2, kind: input, shape index: {}]
  %s3 = inlined_call_operand.hbm [shape: f32[72,128], index: 3, kind: input, shape index: {}]
  %s4 = inlined_call_operand.vmem [shape: f32[72,1], index: 4, kind: input, shape index: {}]
  %s5 = inlined_call_operand.vmem [shape: f32[72,1], index: 5, kind: input, shape index: {}]
  %s6 = inlined_call_operand.vmem [shape: f32[72,1], index: 6, kind: input, shape index: {}]
  %s7 = inlined_call_operand.<no memory space> [shape: f32[1], index: 7, kind: input, shape index: {}]
  %s8 = inlined_call_operand.<no memory space> [shape: f32[1], index: 8, kind: input, shape index: {}]
  %s9 = inlined_call_operand.hbm [shape: f32[1], index: 9, kind: output, shape index: {}]
  %s10 = sld [smem:[#allocation0]]
  $region54: #{tpu_custom_call.1} parent=0
    _
  %s12 = ssub.s32 1, %s10
  %s13 = scalar_select 0, %s12, %s10
  %14 = sst [smem:[#allocation2]] %s7
  %15 = sst [smem:[#allocation3]] %s8
  $region1: #{tpu_custom_call.1} parent=0
    #allocation4 [shape = 'u8[36864]{0}', space=vmem, size = 0x9000, scoped, tag = 'input window, operand 3, single buffered']
    #allocation5 [shape = 's32[1]{0}', space=sflag, size = 0x4, scoped, tag = 'scoped memory for tpu_custom_call.1']
    #allocation6 [shape = 's32[1]{0}', space=sflag, size = 0x4, scoped, tag = 'scoped memory for tpu_custom_call.1']
    #allocation7 [shape = 'u8[512]{0}', space=smem, size = 0x200, scoped, tag = 'output window, operand 0, single buffered']
    %16 = vsyncpa [#allocation5], 0
    %17 = vsyncpa [#allocation6], 0
    // Predicated region
    $region2: #{tpu_custom_call.1} parent=1 // pred_check
      _
    $region3: #{tpu_custom_call.1} parent=1 // pred_check_branch
      %19 = sbr.rel (0) target = $region5
    $region4: #{tpu_custom_call.1} parent=1 // pred_region
      _
    $region5: #{tpu_custom_call.1} parent=1 // pred_fallthru
      _
    // Predicated region
    $region6: #{tpu_custom_call.1} parent=1 // pred_check
      _
    $region7: #{tpu_custom_call.1} parent=1 // pred_check_branch
      %21 = sbr.rel (0) target = $region9
    $region8: #{tpu_custom_call.1} parent=1 // pred_region
      _
    $region9: #{tpu_custom_call.1} parent=1 // pred_fallthru
      _
    // Predicated region
    $region10: #{tpu_custom_call.1} parent=1 // pred_check
      _
    $region11: #{tpu_custom_call.1} parent=1 // pred_check_branch
      %23 = sbr.rel (0) target = $region13
    $region12: #{tpu_custom_call.1} parent=1 // pred_region
      _
    $region13: #{tpu_custom_call.1} parent=1 // pred_fallthru
      _
    // Predicated region
    $region14: #{tpu_custom_call.1} parent=1 // pred_check
      _
    $region15: #{tpu_custom_call.1} parent=1 // pred_check_branch
      %25 = sbr.rel (0) target = $region17
    $region16: #{tpu_custom_call.1} parent=1 // pred_region
      %s27 = ssub.s32 1152, 1152
      %28 = vsyncadd [#allocation5], %s27
      %s29 = sshll.u32 [#allocation4], 4
      %s30 = int_to_ptr.vmem [resolvable:$true] %s29
      %35 = dma.hbm_to_vmem [thread:$0]  %s3, 1152, %s30, [#allocation5], 128, 128, 8
    $region17: #{tpu_custom_call.1} parent=1 // pred_fallthru
      _
    // Predicated region
    $region18: #{tpu_custom_call.1} parent=1 // pred_check
      _
    $region19: #{tpu_custom_call.1} parent=1 // pred_check_branch
      %37 = sbr.rel (0) target = $region21
    $region20: #{tpu_custom_call.1} parent=1 // pred_region
      _
    $region21: #{tpu_custom_call.1} parent=1 // pred_fallthru
      _
    // Predicated region
    $region22: #{tpu_custom_call.1} parent=1 // pred_check
      _
    $region23: #{tpu_custom_call.1} parent=1 // pred_check_branch
      %39 = sbr.rel (0) target = $region25
    $region24: #{tpu_custom_call.1} parent=1 // pred_region
      _
    $region25: #{tpu_custom_call.1} parent=1 // pred_fallthru
      _
    // Predicated region
    $region26: #{tpu_custom_call.1} parent=1 // pred_check
      _
    $region27: #{tpu_custom_call.1} parent=1 // pred_check_branch
      %41 = sbr.rel (0) target = $region29
    $region28: #{tpu_custom_call.1} parent=1 // pred_region
      _
    $region29: #{tpu_custom_call.1} parent=1 // pred_fallthru
      _
    // Predicated region
    $region30: #{tpu_custom_call.1} parent=1 // pred_check
      _
    $region31: #{tpu_custom_call.1} parent=1 // pred_check_branch
      %43 = sbr.rel (0) target = $region33
    $region32: #{tpu_custom_call.1} parent=1 // pred_region
      _
    $region33: #{tpu_custom_call.1} parent=1 // pred_fallthru
      _
    // Predicated region
    $region34: #{tpu_custom_call.1} parent=1 // pred_check
      _
    $region35: #{tpu_custom_call.1} parent=1 // pred_check_branch
      %45 = sbr.rel (0) target = $region37
    $region36: #{tpu_custom_call.1} parent=1 // pred_region
      _
    $region37: #{tpu_custom_call.1} parent=1 // pred_fallthru
      _
    // Predicated region
    $region38: #{tpu_custom_call.1} parent=1 // pred_check
      _
    $region39: #{tpu_custom_call.1} parent=1 // pred_check_branch
      %47 = sbr.rel (0) target = $region41
    $region40: #{tpu_custom_call.1} parent=1 // pred_region
      %48 = dma.done [#allocation5], 1152
    $region41: #{tpu_custom_call.1} parent=1 // pred_fallthru
      _
    %p49 = scmp.eq.s32.totalorder 0, 0
    // Predicated region
    $region42: #{tpu_custom_call.1} parent=1 // pred_check
      %p50 = pneg %p49
    $region43: #{tpu_custom_call.1} parent=1 // pred_check_branch
      %52 = sbr.rel (%p50) target = $region45
    $region44: #{tpu_custom_call.1} parent=1 // pred_region
      %s53 = scalar_lea.smem [#allocation7], 0
      %54 = sst [smem:[%s53]] 0.0
    $region45: #{tpu_custom_call.1} parent=1 // pred_fallthru
      _
    %s55 = sld [smem:[#allocation2]]
    %s56 = sld [smem:[#allocation3]]
    %v57 = vld [vmem:[%s0] sm:$0xff]
    %v58 = vld [vmem:[%s0 + $0x8] sm:$0xff]
    %v59 = vld [vmem:[%s0 + $0x10] sm:$0xff]
    %v60 = vld [vmem:[%s0 + $0x18] sm:$0xff]
    %v61 = vld [vmem:[%s0 + $0x20] sm:$0xff]
    %v62 = vld [vmem:[%s0 + $0x28] sm:$0xff]
    %v63 = vld [vmem:[%s0 + $0x30] sm:$0xff]
    %v64 = vld [vmem:[%s0 + $0x38] sm:$0xff]
    %v65 = vld [vmem:[%s0 + $0x40] sm:$0xff]
    %v66 = vld [vmem:[%s1] sm:$0xff]
    %v67 = vld [vmem:[%s1 + $0x8] sm:$0xff]
    %v68 = vld [vmem:[%s1 + $0x10] sm:$0xff]
    %v69 = vld [vmem:[%s1 + $0x18] sm:$0xff]
    %v70 = vld [vmem:[%s1 + $0x20] sm:$0xff]
    %v71 = vld [vmem:[%s1 + $0x28] sm:$0xff]
    %v72 = vld [vmem:[%s1 + $0x30] sm:$0xff]
    %v73 = vld [vmem:[%s1 + $0x38] sm:$0xff]
    %v74 = vld [vmem:[%s1 + $0x40] sm:$0xff]
    %v75 = vld [vmem:[%s2] sm:$0xff]
    %v76 = vld [vmem:[%s2 + $0x8] sm:$0xff]
    %v77 = vld [vmem:[%s2 + $0x10] sm:$0xff]
    %v78 = vld [vmem:[%s2 + $0x18] sm:$0xff]
    %v79 = vld [vmem:[%s2 + $0x20] sm:$0xff]
    %v80 = vld [vmem:[%s2 + $0x28] sm:$0xff]
    %v81 = vld [vmem:[%s2 + $0x30] sm:$0xff]
    %v82 = vld [vmem:[%s2 + $0x38] sm:$0xff]
    %v83 = vld [vmem:[%s2 + $0x40] sm:$0xff]
    %v84 = vld [vmem:[#allocation4] sm:$0xff]
    %v85 = vld [vmem:[#allocation4 + $0x8] sm:$0xff]
    %v86 = vld [vmem:[#allocation4 + $0x10] sm:$0xff]
    %v87 = vld [vmem:[#allocation4 + $0x18] sm:$0xff]
    %v88 = vld [vmem:[#allocation4 + $0x20] sm:$0xff]
    %v89 = vld [vmem:[#allocation4 + $0x28] sm:$0xff]
    %v90 = vld [vmem:[#allocation4 + $0x30] sm:$0xff]
    %v91 = vld [vmem:[#allocation4 + $0x38] sm:$0xff]
    %v92 = vld [vmem:[#allocation4 + $0x40] sm:$0xff]
    %v93 = vmul.f32 %v57, %v84
    %v94 = vmul.f32 %v58, %v85
    %v95 = vmul.f32 %v59, %v86
    %v96 = vmul.f32 %v60, %v87
    %v97 = vmul.f32 %v61, %v88
    %v98 = vmul.f32 %v62, %v89
    %v99 = vmul.f32 %v63, %v90
    %v100 = vmul.f32 %v64, %v91
    %v101 = vmul.f32 %v65, %v92
    %102 = vadd.xlane.f32.xlu0 %v93
    %v103 = vpop.xlane.xlu0 %102
    %104 = vadd.xlane.f32.xlu0 %v94
    %v105 = vpop.xlane.xlu0 %104
    %106 = vadd.xlane.f32.xlu0 %v95
    %v107 = vpop.xlane.xlu0 %106
    %108 = vadd.xlane.f32.xlu0 %v96
    %v109 = vpop.xlane.xlu0 %108
    %110 = vadd.xlane.f32.xlu0 %v97
    %v111 = vpop.xlane.xlu0 %110
    %112 = vadd.xlane.f32.xlu0 %v98
    %v113 = vpop.xlane.xlu0 %112
    %114 = vadd.xlane.f32.xlu0 %v99
    %v115 = vpop.xlane.xlu0 %114
    %116 = vadd.xlane.f32.xlu0 %v100
    %v117 = vpop.xlane.xlu0 %116
    %118 = vadd.xlane.f32.xlu0 %v101
    %v119 = vpop.xlane.xlu0 %118
    %v120 = vmul.f32 %v103, %v84
    %v121 = vmul.f32 %v105, %v85
    %v122 = vmul.f32 %v107, %v86
    %v123 = vmul.f32 %v109, %v87
    %v124 = vmul.f32 %v111, %v88
    %v125 = vmul.f32 %v113, %v89
    %v126 = vmul.f32 %v115, %v90
    %v127 = vmul.f32 %v117, %v91
    %v128 = vmul.f32 %v119, %v92
    %v129 = vsub.f32 %v57, %v120
    %v130 = vsub.f32 %v58, %v121
    %v131 = vsub.f32 %v59, %v122
    %v132 = vsub.f32 %v60, %v123
    %v133 = vsub.f32 %v61, %v124
    %v134 = vsub.f32 %v62, %v125
    %v135 = vsub.f32 %v63, %v126
    %v136 = vsub.f32 %v64, %v127
    %v137 = vsub.f32 %v65, %v128
    %v138 = vmul.f32 %v75, %v84
    %v139 = vmul.f32 %v76, %v85
    %v140 = vmul.f32 %v77, %v86
    %v141 = vmul.f32 %v78, %v87
    %v142 = vmul.f32 %v79, %v88
    %v143 = vmul.f32 %v80, %v89
    %v144 = vmul.f32 %v81, %v90
    %v145 = vmul.f32 %v82, %v91
    %v146 = vmul.f32 %v83, %v92
    %147 = vadd.xlane.f32.xlu0 %v138
    %v148 = vpop.xlane.xlu0 %147
    %149 = vadd.xlane.f32.xlu0 %v139
    %v150 = vpop.xlane.xlu0 %149
    %151 = vadd.xlane.f32.xlu0 %v140
    %v152 = vpop.xlane.xlu0 %151
    %153 = vadd.xlane.f32.xlu0 %v141
    %v154 = vpop.xlane.xlu0 %153
    %155 = vadd.xlane.f32.xlu0 %v142
    %v156 = vpop.xlane.xlu0 %155
    %157 = vadd.xlane.f32.xlu0 %v143
    %v158 = vpop.xlane.xlu0 %157
    %159 = vadd.xlane.f32.xlu0 %v144
    %v160 = vpop.xlane.xlu0 %159
    %161 = vadd.xlane.f32.xlu0 %v145
    %v162 = vpop.xlane.xlu0 %161
    %163 = vadd.xlane.f32.xlu0 %v146
    %v164 = vpop.xlane.xlu0 %163
    %v165 = vmul.f32 %v148, %v84
    %v166 = vmul.f32 %v150, %v85
    %v167 = vmul.f32 %v152, %v86
    %v168 = vmul.f32 %v154, %v87
    %v169 = vmul.f32 %v156, %v88
    %v170 = vmul.f32 %v158, %v89
    %v171 = vmul.f32 %v160, %v90
    %v172 = vmul.f32 %v162, %v91
    %v173 = vmul.f32 %v164, %v92
    %v174 = vsub.f32 %v75, %v165
    %v175 = vsub.f32 %v76, %v166
    %v176 = vsub.f32 %v77, %v167
    %v177 = vsub.f32 %v78, %v168
    %v178 = vsub.f32 %v79, %v169
    %v179 = vsub.f32 %v80, %v170
    %v180 = vsub.f32 %v81, %v171
    %v181 = vsub.f32 %v82, %v172
    %v182 = vsub.f32 %v83, %v173
    %v183 = vmul.f32 %v129, %v174
    %v184 = vmul.f32 %v130, %v175
    %v185 = vmul.f32 %v131, %v176
    %v186 = vmul.f32 %v132, %v177
    %v187 = vmul.f32 %v133, %v178
    %v188 = vmul.f32 %v134, %v179
    %v189 = vmul.f32 %v135, %v180
    %v190 = vmul.f32 %v136, %v181
    %v191 = vmul.f32 %v137, %v182
    %v192 = vmul.f32 %v66, %v183
    %v193 = vmul.f32 %v67, %v184
    %v194 = vmul.f32 %v68, %v185
    %v195 = vmul.f32 %v69, %v186
    %v196 = vmul.f32 %v70, %v187
    %v197 = vmul.f32 %v71, %v188
    %v198 = vmul.f32 %v72, %v189
    %v199 = vmul.f32 %v73, %v190
    %v200 = vmul.f32 %v74, %v191
    %201 = vadd.xlane.f32.xlu0 %v192
    %v202 = vpop.xlane.xlu0 %201
    %203 = vadd.xlane.f32.xlu0 %v193
    %v204 = vpop.xlane.xlu0 %203
    %205 = vadd.xlane.f32.xlu0 %v194
    %v206 = vpop.xlane.xlu0 %205
    %207 = vadd.xlane.f32.xlu0 %v195
    %v208 = vpop.xlane.xlu0 %207
    %209 = vadd.xlane.f32.xlu0 %v196
    %v210 = vpop.xlane.xlu0 %209
    %211 = vadd.xlane.f32.xlu0 %v197
    %v212 = vpop.xlane.xlu0 %211
    %213 = vadd.xlane.f32.xlu0 %v198
    %v214 = vpop.xlane.xlu0 %213
    %215 = vadd.xlane.f32.xlu0 %v199
    %v216 = vpop.xlane.xlu0 %215
    %217 = vadd.xlane.f32.xlu0 %v200
    %v218 = vpop.xlane.xlu0 %217
    %v219 = vstv %s55
    %v220 = vmul.f32 %v219, %v202
    %v221 = vmul.f32 %v219, %v204
    %v222 = vmul.f32 %v219, %v206
    %v223 = vmul.f32 %v219, %v208
    %v224 = vmul.f32 %v219, %v210
    %v225 = vmul.f32 %v219, %v212
    %v226 = vmul.f32 %v219, %v214
    %v227 = vmul.f32 %v219, %v216
    %v228 = vmul.f32 %v219, %v218
    %v229 = vstv %s56
    %v230 = vadd.f32 %v220, %v229
    %v231 = vadd.f32 %v221, %v229
    %v232 = vadd.f32 %v222, %v229
    %v233 = vadd.f32 %v223, %v229
    %v234 = vadd.f32 %v224, %v229
    %v235 = vadd.f32 %v225, %v229
    %v236 = vadd.f32 %v226, %v229
    %v237 = vadd.f32 %v227, %v229
    %v238 = vadd.f32 %v228, %v229
    %v239 = vxor.u32 %v230, 2147483648
    %v240 = vxor.u32 %v231, 2147483648
    %v241 = vxor.u32 %v232, 2147483648
    %v242 = vxor.u32 %v233, 2147483648
    %v243 = vxor.u32 %v234, 2147483648
    %v244 = vxor.u32 %v235, 2147483648
    %v245 = vxor.u32 %v236, 2147483648
    %v246 = vxor.u32 %v237, 2147483648
    %v247 = vxor.u32 %v238, 2147483648
    %v248 = vmul.f32 %v239, 1.442695
    %v249 = vpow.pop %v248
    %v250 = vmul.f32 %v240, 1.442695
    %v251 = vpow.pop %v250
    %v252 = vmul.f32 %v241, 1.442695
    %v253 = vpow.pop %v252
    %v254 = vmul.f32 %v242, 1.442695
    %v255 = vpow.pop %v254
    %v256 = vmul.f32 %v243, 1.442695
    %v257 = vpow.pop %v256
    %v258 = vmul.f32 %v244, 1.442695
    %v259 = vpow.pop %v258
    %v260 = vmul.f32 %v245, 1.442695
    %v261 = vpow.pop %v260
    %v262 = vmul.f32 %v246, 1.442695
    %v263 = vpow.pop %v262
    %v264 = vmul.f32 %v247, 1.442695
    %v265 = vpow.pop %v264
    %v266 = vadd.f32 %v249, 1.0
    %v267 = vadd.f32 %v251, 1.0
    %v268 = vadd.f32 %v253, 1.0
    %v269 = vadd.f32 %v255, 1.0
    %v270 = vadd.f32 %v257, 1.0
    %v271 = vadd.f32 %v259, 1.0
    %v272 = vadd.f32 %v261, 1.0
    %v273 = vadd.f32 %v263, 1.0
    %v274 = vadd.f32 %v265, 1.0
    %v275 = vrcp.pop %v266
    %v276 = vmul.f32 1.0, %v275
    %v277 = vrcp.pop %v267
    %v278 = vmul.f32 1.0, %v277
    %v279 = vrcp.pop %v268
    %v280 = vmul.f32 1.0, %v279
    %v281 = vrcp.pop %v269
    %v282 = vmul.f32 1.0, %v281
    %v283 = vrcp.pop %v270
    %v284 = vmul.f32 1.0, %v283
    %v285 = vrcp.pop %v271
    %v286 = vmul.f32 1.0, %v285
    %v287 = vrcp.pop %v272
    %v288 = vmul.f32 1.0, %v287
    %v289 = vrcp.pop %v273
    %v290 = vmul.f32 1.0, %v289
    %v291 = vrcp.pop %v274
    %v292 = vmul.f32 1.0, %v291
    %v293 = vld [vmem:[%s5] sm:$0xff]
    %v294 = vld [vmem:[%s5 + $0x8] sm:$0xff]
    %v295 = vld [vmem:[%s5 + $0x10] sm:$0xff]
    %v296 = vld [vmem:[%s5 + $0x18] sm:$0xff]
    %v297 = vld [vmem:[%s5 + $0x20] sm:$0xff]
    %v298 = vld [vmem:[%s5 + $0x28] sm:$0xff]
    %v299 = vld [vmem:[%s5 + $0x30] sm:$0xff]
    %v300 = vld [vmem:[%s5 + $0x38] sm:$0xff]
    %v301 = vld [vmem:[%s5 + $0x40] sm:$0xff]
    %v302 = vld [vmem:[%s4] sm:$0xff]
    %v303 = vld [vmem:[%s4 + $0x8] sm:$0xff]
    %v304 = vld [vmem:[%s4 + $0x10] sm:$0xff]
    %v305 = vld [vmem:[%s4 + $0x18] sm:$0xff]
    %v306 = vld [vmem:[%s4 + $0x20] sm:$0xff]
    %v307 = vld [vmem:[%s4 + $0x28] sm:$0xff]
    %v308 = vld [vmem:[%s4 + $0x30] sm:$0xff]
    %v309 = vld [vmem:[%s4 + $0x38] sm:$0xff]
    %v310 = vld [vmem:[%s4 + $0x40] sm:$0xff]
    %v311 = vsub.f32 %v276, %v302
    %v312 = vsub.f32 %v278, %v303
    %v313 = vsub.f32 %v280, %v304
    %v314 = vsub.f32 %v282, %v305
    %v315 = vsub.f32 %v284, %v306
    %v316 = vsub.f32 %v286, %v307
    %v317 = vsub.f32 %v288, %v308
    %v318 = vsub.f32 %v290, %v309
    %v319 = vsub.f32 %v292, %v310
    %v320 = vmul.f32 %v311, %v311
    %v321 = vmul.f32 %v312, %v312
    %v322 = vmul.f32 %v313, %v313
    %v323 = vmul.f32 %v314, %v314
    %v324 = vmul.f32 %v315, %v315
    %v325 = vmul.f32 %v316, %v316
    %v326 = vmul.f32 %v317, %v317
    %v327 = vmul.f32 %v318, %v318
    %v328 = vmul.f32 %v319, %v319
    %v329 = vmul.f32 %v293, %v320
    %v330 = vmul.f32 %v294, %v321
    %v331 = vmul.f32 %v295, %v322
    %v332 = vmul.f32 %v296, %v323
    %v333 = vmul.f32 %v297, %v324
    %v334 = vmul.f32 %v298, %v325
    %v335 = vmul.f32 %v299, %v326
    %v336 = vmul.f32 %v300, %v327
    %v337 = vmul.f32 %v301, %v328
    %v338 = vld [vmem:[%s6] sm:$0xff]
    %v339 = vld [vmem:[%s6 + $0x8] sm:$0xff]
    %v340 = vld [vmem:[%s6 + $0x10] sm:$0xff]
    %v341 = vld [vmem:[%s6 + $0x18] sm:$0xff]
    %v342 = vld [vmem:[%s6 + $0x20] sm:$0xff]
    %v343 = vld [vmem:[%s6 + $0x28] sm:$0xff]
    %v344 = vld [vmem:[%s6 + $0x30] sm:$0xff]
    %v345 = vld [vmem:[%s6 + $0x38] sm:$0xff]
    %v346 = vld [vmem:[%s6 + $0x40] sm:$0xff]
    %v347 = vmul.f32 %v129, %v129
    %v348 = vmul.f32 %v130, %v130
    %v349 = vmul.f32 %v131, %v131
    %v350 = vmul.f32 %v132, %v132
    %v351 = vmul.f32 %v133, %v133
    %v352 = vmul.f32 %v134, %v134
    %v353 = vmul.f32 %v135, %v135
    %v354 = vmul.f32 %v136, %v136
    %v355 = vmul.f32 %v137, %v137
    %356 = vadd.xlane.f32.xlu0 %v347
    %v357 = vpop.xlane.xlu0 %356
    %358 = vadd.xlane.f32.xlu0 %v348
    %v359 = vpop.xlane.xlu0 %358
    %360 = vadd.xlane.f32.xlu0 %v349
    %v361 = vpop.xlane.xlu0 %360
    %362 = vadd.xlane.f32.xlu0 %v350
    %v363 = vpop.xlane.xlu0 %362
    %364 = vadd.xlane.f32.xlu0 %v351
    %v365 = vpop.xlane.xlu0 %364
    %366 = vadd.xlane.f32.xlu0 %v352
    %v367 = vpop.xlane.xlu0 %366
    %368 = vadd.xlane.f32.xlu0 %v353
    %v369 = vpop.xlane.xlu0 %368
    %370 = vadd.xlane.f32.xlu0 %v354
    %v371 = vpop.xlane.xlu0 %370
    %372 = vadd.xlane.f32.xlu0 %v355
    %v373 = vpop.xlane.xlu0 %372
    %v374 = vmul.f32 %v66, %v66
    %v375 = vmul.f32 %v67, %v67
    %v376 = vmul.f32 %v68, %v68
    %v377 = vmul.f32 %v69, %v69
    %v378 = vmul.f32 %v70, %v70
    %v379 = vmul.f32 %v71, %v71
    %v380 = vmul.f32 %v72, %v72
    %v381 = vmul.f32 %v73, %v73
    %v382 = vmul.f32 %v74, %v74
    %383 = vadd.xlane.f32.xlu0 %v374
    %v384 = vpop.xlane.xlu0 %383
    %385 = vadd.xlane.f32.xlu0 %v375
    %v386 = vpop.xlane.xlu0 %385
    %387 = vadd.xlane.f32.xlu0 %v376
    %v388 = vpop.xlane.xlu0 %387
    %389 = vadd.xlane.f32.xlu0 %v377
    %v390 = vpop.xlane.xlu0 %389
    %391 = vadd.xlane.f32.xlu0 %v378
    %v392 = vpop.xlane.xlu0 %391
    %393 = vadd.xlane.f32.xlu0 %v379
    %v394 = vpop.xlane.xlu0 %393
    %395 = vadd.xlane.f32.xlu0 %v380
    %v396 = vpop.xlane.xlu0 %395
    %397 = vadd.xlane.f32.xlu0 %v381
    %v398 = vpop.xlane.xlu0 %397
    %399 = vadd.xlane.f32.xlu0 %v382
    %v400 = vpop.xlane.xlu0 %399
    %v401 = vadd.f32 %v357, %v384
    %v402 = vadd.f32 %v359, %v386
    %v403 = vadd.f32 %v361, %v388
    %v404 = vadd.f32 %v363, %v390
    %v405 = vadd.f32 %v365, %v392
    %v406 = vadd.f32 %v367, %v394
    %v407 = vadd.f32 %v369, %v396
    %v408 = vadd.f32 %v371, %v398
    %v409 = vadd.f32 %v373, %v400
    %v410 = vmul.f32 %v174, %v174
    %v411 = vmul.f32 %v175, %v175
    %v412 = vmul.f32 %v176, %v176
    %v413 = vmul.f32 %v177, %v177
    %v414 = vmul.f32 %v178, %v178
    %v415 = vmul.f32 %v179, %v179
    %v416 = vmul.f32 %v180, %v180
    %v417 = vmul.f32 %v181, %v181
    %v418 = vmul.f32 %v182, %v182
    %419 = vadd.xlane.f32.xlu0 %v410
    %v420 = vpop.xlane.xlu0 %419
    %421 = vadd.xlane.f32.xlu0 %v411
    %v422 = vpop.xlane.xlu0 %421
    %423 = vadd.xlane.f32.xlu0 %v412
    %v424 = vpop.xlane.xlu0 %423
    %425 = vadd.xlane.f32.xlu0 %v413
    %v426 = vpop.xlane.xlu0 %425
    %427 = vadd.xlane.f32.xlu0 %v414
    %v428 = vpop.xlane.xlu0 %427
    %429 = vadd.xlane.f32.xlu0 %v415
    %v430 = vpop.xlane.xlu0 %429
    %431 = vadd.xlane.f32.xlu0 %v416
    %v432 = vpop.xlane.xlu0 %431
    %433 = vadd.xlane.f32.xlu0 %v417
    %v434 = vpop.xlane.xlu0 %433
    %435 = vadd.xlane.f32.xlu0 %v418
    %v436 = vpop.xlane.xlu0 %435
    %v437 = vadd.f32 %v401, %v420
    %v438 = vadd.f32 %v402, %v422
    %v439 = vadd.f32 %v403, %v424
    %v440 = vadd.f32 %v404, %v426
    %v441 = vadd.f32 %v405, %v428
    %v442 = vadd.f32 %v406, %v430
    %v443 = vadd.f32 %v407, %v432
    %v444 = vadd.f32 %v408, %v434
    %v445 = vadd.f32 %v409, %v436
    %v446 = vmul.f32 %v338, %v437
    %v447 = vmul.f32 %v339, %v438
    %v448 = vmul.f32 %v340, %v439
    %v449 = vmul.f32 %v341, %v440
    %v450 = vmul.f32 %v342, %v441
    %v451 = vmul.f32 %v343, %v442
    %v452 = vmul.f32 %v344, %v443
    %v453 = vmul.f32 %v345, %v444
    %v454 = vmul.f32 %v346, %v445
    %s455 = sld [smem:[#allocation7]]
    %v456 = vadd.f32 %v329, %v446
    %v457 = vadd.f32 %v330, %v447
    %v458 = vadd.f32 %v331, %v448
    %v459 = vadd.f32 %v332, %v449
    %v460 = vadd.f32 %v333, %v450
    %v461 = vadd.f32 %v334, %v451
    %v462 = vadd.f32 %v335, %v452
    %v463 = vadd.f32 %v336, %v453
    %v464 = vadd.f32 %v337, %v454
    %vm465 = vcmask 7168
    %v466 = vsel %vm465, %v456, 0.0
    %v467 = vsel %vm465, %v457, 0.0
    %v468 = vadd.f32 %v466, %v467
    %v469 = vsel %vm465, %v458, 0.0
    %v470 = vadd.f32 %v468, %v469
    %v471 = vsel %vm465, %v459, 0.0
    %v472 = vadd.f32 %v470, %v471
    %v473 = vsel %vm465, %v460, 0.0
    %v474 = vadd.f32 %v472, %v473
    %v475 = vsel %vm465, %v461, 0.0
    %v476 = vadd.f32 %v474, %v475
    %v477 = vsel %vm465, %v462, 0.0
    %v478 = vadd.f32 %v476, %v477
    %v479 = vsel %vm465, %v463, 0.0
    %v480 = vadd.f32 %v478, %v479
    %v481 = vsel %vm465, %v464, 0.0
    %v482 = vadd.f32 %v480, %v481
    %483 = vadd.xlane.f32.xlu0 %v482
    %v484 = vpop.xlane.xlu0 %483
    %v485 = vrot.slane %v484, 4
    %v486 = vadd.f32 %v484, %v485
    %v487 = vrot.slane %v486, 2
    %v488 = vadd.f32 %v486, %v487
    %v489 = vrot.slane %v488, 1
    %v490 = vadd.f32 %v488, %v489
    %s491 = vtos %v490
    %s492 = sadd.f32 %s455, %s491
    %s493 = scalar_lea.smem [#allocation7], 0
    %494 = sst [smem:[%s493]] %s492
    // Predicated region
    $region46: #{tpu_custom_call.1} parent=1 // pred_check
      _
    $region47: #{tpu_custom_call.1} parent=1 // pred_check_branch
      %496 = sbr.rel (0) target = $region49
    $region48: #{tpu_custom_call.1} parent=1 // pred_region
      %s498 = ssub.s32 16, 16
      %499 = vsyncadd [#allocation6], %s498
      %502 = dma.smem_to_hbm [#allocation7], 16, %s9, [#allocation6]
    $region49: #{tpu_custom_call.1} parent=1 // pred_fallthru
      _
    // Predicated region
    $region50: #{tpu_custom_call.1} parent=1 // pred_check
      _
    $region51: #{tpu_custom_call.1} parent=1 // pred_check_branch
      %504 = sbr.rel (0) target = $region53
    $region52: #{tpu_custom_call.1} parent=1 // pred_region
      %505 = dma.done [#allocation6], 16
    $region53: #{tpu_custom_call.1} parent=1 // pred_fallthru
      _
    %506 = sfence
    %507 = vsyncpa [#allocation5], 1
    %508 = vsyncpa [#allocation6], 1

</llo_original>
